<compile_context>
chip_gen: v6e
topology: v6e:2x2x1
jax: 0.10.0
libtpu: 0.0.40
codegen_flags: <defaults>
</compile_context>

<pallas_src>
import numpy as np
import jax
import jax.numpy as jnp
from jax.experimental import pallas as pl
from jax.experimental.pallas import tpu as pltpu

N_QUBITS = 12
IMG = 14                      # (14 - 4)/2 + 1 = 6  -> 6*6 = 36 circuit inputs
KSIZE, STRIDE, OUT_HW = 4, 2, 6
N_PATCH = OUT_HW * OUT_HW     # 36
PATCH = KSIZE * KSIZE         # 16

# cfg.train.* (synthetic, deterministic)
CFG_CONV_WEIGHT = 0.5
CFG_BIAS = 0.1
CFG_QUANTUM_WEIGHT = 1.0


# -----------------------------------------------------------------------------
# Host-side quantum-operator construction (2x2 gate algebra / Kronecker glue)
# -----------------------------------------------------------------------------
def rx(t):
    c, s = np.cos(t / 2.0), np.sin(t / 2.0)
    return np.array([[c, -1j * s], [-1j * s, c]], dtype=np.complex128)


def ry(t):
    c, s = np.cos(t / 2.0), np.sin(t / 2.0)
    return np.array([[c, -s], [s, c]], dtype=np.complex128)


ISWAP4 = np.array([[1, 0, 0, 0],
                   [0, 0, 1j, 0],
                   [0, 1j, 0, 0],
                   [0, 0, 0, 1]], dtype=np.complex128)


def kron_all(mats):
    out = np.array([[1.0 + 0j]], dtype=np.complex128)
    for m in mats:
        out = np.kron(out, m)
    return out


def embed_pair(n_sub, pos):
    # ISWAP on adjacent positions (pos, pos+1) of an n_sub-qubit subregister (pos 0 = MSB)
    return kron_all([np.eye(2 ** pos), ISWAP4, np.eye(2 ** (n_sub - pos - 2))])


def compose_chain(n_sub, temporal_positions):
    m = np.eye(2 ** n_sub, dtype=np.complex128)
    for pos in temporal_positions:
        m = embed_pair(n_sub, pos) @ m
    return m


U_COL_ASC = compose_chain(7, [5, 4, 3, 2, 1, 0])   # ISWAP(11,10)..(6,5)  (ascending chain)
U_ROW_ASC = compose_chain(5, [3, 2, 1, 0])         # ISWAP(4,3)..(1,0)    (ascending chain)
U_ROW_DESC = compose_chain(5, [0, 1, 2, 3])        # ISWAP(1,0)..(4,3)    (descending chain)
# NOTE: the descending boundary ISWAP(5,4) and descending col ISWAPs (6,5)..(11,10) are
# unitaries that commute with the wire-0 rotation + projector, so they do not change the
# measured expectation value and are omitted entirely.

# bit reversal of the 5-bit row index: wire 4 -> row MSB (value 16), wire 0 -> row LSB
BITREV5 = np.array([int(format(r, "05b")[::-1], 2) for r in range(32)])


def build_per_image(flat36, qp, y_bit):
    """Folded, data-dependent circuit operators for one image.

    Returns:
      a     : (32,)   complex row factor of the phase-1 product state (bit-reversed basis)
      c     : (128,)  complex col factor after the ascending col-ISWAPs
      lfold : (32,32) complex folded row operator
              = (projector . wire-0 rotations) @ U_ROW_DESC @ L2 @ U_ROW_ASC  (bit-reversed)
      r2t   : (128,128) complex right-applied col operator (phase-2 col rotations)^T
    """
    data = np.asarray(flat36, dtype=np.float64).reshape(6, 6)
    u1, u2 = [], []
    for i in range(6):
        r = data[i]
        u1.append(rx(r[2]) @ ry(r[1]) @ rx(r[0]))   # wire 2i   : RX, RY, RX
        u1.append(rx(r[5]) @ ry(r[4]) @ rx(r[3]))   # wire 2i+1 : RX, RY, RX
        u2.append(ry(r[2]) @ rx(r[1]) @ ry(r[0]))   # wire 2i   : RY, RX, RY
        u2.append(ry(r[5]) @ rx(r[4]) @ ry(r[3]))   # wire 2i+1 : RY, RX, RY
    l1 = kron_all(u1[:5]); r1 = kron_all(u1[5:])
    l2 = kron_all(u2[:5]); r2 = kron_all(u2[5:])

    a = l1[:, 0]                          # phase-1 row factor applied to |00000>
    c = U_COL_ASC @ r1[:, 0]              # phase-1 col factor + ascending col-ISWAPs

    gq = rx(qp[2]) @ ry(qp[1]) @ rx(qp[0])                               # quantum_params (wire 0)
    sel = (((np.arange(32) >> 4) & 1) == y_bit).astype(np.float64)       # wire-0 projector
    lfold = (np.kron(gq, np.eye(16)) * sel[:, None]) @ U_ROW_DESC @ l2 @ U_ROW_ASC

    # switch to the bit-reversed row basis (wire 4 = row MSB) for the in-kernel ISWAP flip
    a = a[BITREV5]
    lfold = lfold[np.ix_(BITREV5, BITREV5)]
    return a, c, lfold, r2.T


def pack_batch(flat_np, qp_np, y_np, nb):
    """Stack per-image operators, padded to a multiple of nb images."""
    b = flat_np.shape[0]
    bp = ((b + nb - 1) // nb) * nb
    ar = np.zeros((bp, 32, 1), np.float32); ai = np.zeros_like(ar)
    br = np.zeros((bp, 1, 128), np.float32); bi = np.zeros_like(br)
    lst = np.zeros((bp, 64, 32), np.float32)        # [L_r ; L_i] stacked along rows
    rst = np.zeros((bp, 128, 256), np.float32)      # [R_r | R_i] stacked along cols
    for k in range(b):
        a, c, lf, rt = build_per_image(flat_np[k], qp_np, int(y_np[k] != 0))
        ar[k, :, 0] = a.real; ai[k, :, 0] = a.imag
        br[k, 0, :] = c.real; bi[k, 0, :] = c.imag
        lst[k] = np.concatenate([lf.real, lf.imag], axis=0)
        rst[k] = np.concatenate([rt.real, rt.imag], axis=1)
    return tuple(jnp.asarray(x) for x in (ar, ai, br, bi, lst, rst))


# -----------------------------------------------------------------------------
# Pallas kernel 1: conv as a single lane-dense matmul  (1,16) @ (16, B*36) + bias
# -----------------------------------------------------------------------------
def _conv_kernel(w_ref, p_ref, b_ref, o_ref):
    o_ref[...] = (jnp.dot(w_ref[...], p_ref[...],
                          preferred_element_type=jnp.float32) + b_ref[0, 0])


def conv_pallas(patches_t, w_row, bias):
    k, n = patches_t.shape
    out = pl.pallas_call(
        _conv_kernel,
        out_shape=jax.ShapeDtypeStruct((1, n), jnp.float32),
        grid=(1,),
        in_specs=[
            pl.BlockSpec((1, k), lambda i: (0, 0)),
            pl.BlockSpec((k, n), lambda i: (0, 0)),
            pl.BlockSpec((1, 1), lambda i: (0, 0)),
        ],
        out_specs=pl.BlockSpec((1, n), lambda i: (0, 0)),
    )(w_row, patches_t, bias)
    return out[0]                                   # (B*36,) flattened conv maps


def im2col(images):
    b = images.shape[0]
    cols = []
    for oh in range(OUT_HW):
        for ow in range(OUT_HW):
            patch = images[:, 0,
                           oh * STRIDE:oh * STRIDE + KSIZE,
                           ow * STRIDE:ow * STRIDE + KSIZE]
            cols.append(patch.reshape(b, PATCH))
    return jnp.stack(cols, axis=1)                  # (B, 36, 16)


# -----------------------------------------------------------------------------
# Pallas kernel 2: batched 12-qubit statevector evolution -> per-image |T|^2 partial sums
# -----------------------------------------------------------------------------
def _qloss_kernel(ar_ref, ai_ref, br_ref, bi_ref, lst_ref, rst_ref, o_ref):
    ar, ai = ar_ref[...], ai_ref[...]               # (NB, 32, 1)   row factors
    br, bi = br_ref[...], bi_ref[...]               # (NB, 1, 128)  col factors

    # |psi0> = rowfactor (x) colfactor : complex outer product (pure VPU broadcast work)
    s0r = ar * br - ai * bi                         # (NB, 32, 128)
    s0i = ar * bi + ai * br

    # Boundary ISWAP(5,4).  wire 4 = row MSB (bit 16), wire 5 = col MSB (bit 64):
    #   new = S          where the two bits are equal
    #   new = i * S_flip where they differ  (both bits flipped = half-roll rows & cols)
    rbit = (jax.lax.broadcasted_iota(jnp.int32, (32, 128), 0) & 16) != 0
    cbit = (jax.lax.broadcasted_iota(jnp.int32, (32, 128), 1) & 64) != 0
    eq = rbit == cbit                               # (32, 128), broadcast over batch

    def flip(x):                                    # flip row MSB and col MSB (half-rolls)
        x = jnp.concatenate([x[:, 16:, :], x[:, :16, :]], axis=1)
        return jnp.concatenate([x[:, :, 64:], x[:, :, :64]], axis=2)

    s1r = jnp.where(eq, s0r, -flip(s0i))
    s1i = jnp.where(eq, s0i, flip(s0r))

    # Right complex multiply by R2^T (per-image col operator), real/imag fused: one einsum.
    s1ri = jnp.concatenate([s1r, s1i], axis=1)                       # (NB, 64, 128)
    p = jnp.einsum("bij,bjk->bik", s1ri, rst_ref[...],
                   preferred_element_type=jnp.float32)               # (NB, 64, 256)
    s2r = p[:, :32, :128] - p[:, 32:, 128:]
    s2i = p[:, :32, 128:] + p[:, 32:, :128]

    # Left complex multiply by folded row operator (row ISWAPs + phase-2 row rotations +
    # wire-0 rotation + label projector), real/imag fused: one einsum.
    s2ri = jnp.concatenate([s2r, s2i], axis=2)                       # (NB, 32, 256)
    q = jnp.einsum("bij,bjk->bik", lst_ref[...], s2ri,
                   preferred_element_type=jnp.float32)               # (NB, 64, 256)
    tr = q[:, :32, :128] - q[:, 32:, 128:]
    ti = q[:, :32, 128:] + q[:, 32:, :128]

    # per-image, per-row partial sums of |T|^2 (lane reduce); finished in the wrapper
    o_ref[0] = jnp.sum(tr * tr + ti * ti, axis=-1, keepdims=True)    # (NB, 32, 1)


def quantum_psum_pallas(ar, ai, br, bi, lst, rst, nb):
    bp = ar.shape[0]
    g = bp // nb
    return pl.pallas_call(
        _qloss_kernel,
        out_shape=jax.ShapeDtypeStruct((g, nb, 32, 1), jnp.float32),
        grid=(g,),
        in_specs=[
            pl.BlockSpec((nb, 32, 1), lambda i: (i, 0, 0)),
            pl.BlockSpec((nb, 32, 1), lambda i: (i, 0, 0)),
            pl.BlockSpec((nb, 1, 128), lambda i: (i, 0, 0)),
            pl.BlockSpec((nb, 1, 128), lambda i: (i, 0, 0)),
            pl.BlockSpec((nb, 64, 32), lambda i: (i, 0, 0)),
            pl.BlockSpec((nb, 128, 256), lambda i: (i, 0, 0)),
        ],
        out_specs=pl.BlockSpec((1, nb, 32, 1), lambda i: (i, 0, 0, 0)),
        compiler_params=pltpu.CompilerParams(dimension_semantics=("parallel",)),
    )(ar, ai, br, bi, lst, rst)


# -----------------------------------------------------------------------------
# Pure numpy reference (gate-by-gate statevector simulation) for verification
# -----------------------------------------------------------------------------
def ref_qcircuit_expval(flat36, qp, y_bit):
    psi = np.zeros((2,) * N_QUBITS, dtype=np.complex128)
    psi[(0,) * N_QUBITS] = 1.0
    data = np.asarray(flat36, dtype=np.float64).reshape(6, 6)

    def ap1(p, g, w):
        return np.moveaxis(np.tensordot(g, p, axes=([1], [w])), 0, w)

    def ap2(p, g4, w1, w2):
        g = g4.reshape(2, 2, 2, 2)
        return np.moveaxis(np.tensordot(g, p, axes=([2, 3], [w1, w2])), [0, 1], [w1, w2])

    for i in range(6):
        r = data[i]
        psi = ap1(psi, rx(r[0]), 2 * i); psi = ap1(psi, ry(r[1]), 2 * i); psi = ap1(psi, rx(r[2]), 2 * i)
        psi = ap1(psi, rx(r[3]), 2 * i + 1); psi = ap1(psi, ry(r[4]), 2 * i + 1); psi = ap1(psi, rx(r[5]), 2 * i + 1)
    for i in range(N_QUBITS - 1):                            # iswap_layer(True)
        psi = ap2(psi, ISWAP4, N_QUBITS - i - 1, N_QUBITS - i - 2)
    for i in range(6):
        r = data[i]
        psi = ap1(psi, ry(r[0]), 2 * i); psi = ap1(psi, rx(r[1]), 2 * i); psi = ap1(psi, ry(r[2]), 2 * i)
        psi = ap1(psi, ry(r[3]), 2 * i + 1); psi = ap1(psi, rx(r[4]), 2 * i + 1); psi = ap1(psi, ry(r[5]), 2 * i + 1)
    for i in range(N_QUBITS - 1):                            # iswap_layer(False)
        psi = ap2(psi, ISWAP4, i + 1, i)
    psi = ap1(psi, rx(qp[0]), 0); psi = ap1(psi, ry(qp[1]), 0); psi = ap1(psi, rx(qp[2]), 0)
    return float(np.sum(np.abs(psi[y_bit]) ** 2))


if __name__ == "__main__":
    B = 2
    key = jax.random.PRNGKey(0)
    k_img, k_w, k_b, k_q = jax.random.split(key, 4)
    images = jax.random.uniform(k_img, (B, 1, IMG, IMG), jnp.float32, 0.0, 1.0)
    conv_w = jax.random.uniform(k_w, (1, 1, KSIZE, KSIZE), jnp.float32, 0.0, CFG_CONV_WEIGHT)
    conv_b = jax.random.uniform(k_b, (1,), jnp.float32, CFG_BIAS, 1.0)
    qparams = jax.random.uniform(k_q, (3,), jnp.float32, 0.0, CFG_QUANTUM_WEIGHT)
    y = jnp.array([0.0, 1.0], dtype=jnp.float32)

    # ---- Pallas conv (single lane-dense call) --------------------------------
    patches = im2col(images)                                         # glue (reshape)
    patches_t = patches.reshape(B * N_PATCH, PATCH).T                # (16, B*36)
    flat = conv_pallas(patches_t, conv_w.reshape(1, PATCH), conv_b.reshape(1, 1))
    flat = jax.block_until_ready(flat).reshape(B, N_PATCH)           # (B, 36)

    # ---- Host-side per-image operator folding (device sync is inherent here:
    #      the circuit operators are data-dependent 2x2-gate Kronecker algebra) -
    flat_np = np.asarray(flat, dtype=np.float64)
    qp_np = np.asarray(qparams, dtype=np.float64)
    y_np = np.asarray(y)
    NB = 8 if B >= 8 else B                                          # images per grid step
    ar, ai, br, bi, lst, rst = pack_batch(flat_np, qp_np, y_np, NB)
    BP = ar.shape[0]

    # ---- Pallas quantum kernel + loss reduction in the wrapper ---------------
    psum = quantum_psum_pallas(ar, ai, br, bi, lst, rst, NB)         # (G, NB, 32, 1)
    psum = jax.block_until_ready(psum)
    expvals = jnp.sum(psum.reshape(BP, 32), axis=-1)[:B]             # <psi| P_label |psi>
    loss = jnp.mean((1.0 - expvals) ** 2, keepdims=True)             # shape (1,), matches torch
    loss = jax.block_until_ready(loss)

    # ---- Independent numpy reference ----------------------------------------
    img_np = np.asarray(images, dtype=np.float64)
    w_np = np.asarray(conv_w, dtype=np.float64)[0, 0]
    b_np = float(np.asarray(conv_b)[0])
    ref_loss = 0.0
    for bi_ in range(B):
        conv_out = np.zeros((OUT_HW, OUT_HW))
        for oh in range(OUT_HW):
            for ow in range(OUT_HW):
                conv_out[oh, ow] = np.sum(
                    img_np[bi_, 0, oh * STRIDE:oh * STRIDE + KSIZE,
                           ow * STRIDE:ow * STRIDE + KSIZE] * w_np) + b_np
        ev = ref_qcircuit_expval(conv_out.reshape(-1), qp_np, int(y_np[bi_] != 0))
        ref_loss += (1.0 - ev) ** 2
    ref_loss /= B

    np.testing.assert_allclose(float(np.asarray(loss)[0]), ref_loss, rtol=5e-2, atol=5e-3)
    print("KERNEL_OK")
</pallas_src>

<mosaic_0001>
module attributes {stable_mosaic.version = 11 : i64} {
  func.func @_conv_kernel(%arg0: i32, %arg1: memref<1x16xf32, #tpu.memory_space<vmem>>, %arg2: memref<16x72xf32, #tpu.memory_space<vmem>>, %arg3: memref<1x1xf32, #tpu.memory_space<vmem>>, %arg4: memref<1x72xf32, #tpu.memory_space<vmem>>) attributes {dimension_semantics = [#tpu.dimension_semantics<arbitrary>], iteration_bounds = array<i64: 1>, scalar_prefetch = 0 : i64, scratch_operands = 0 : i64, tpu.core_type = #tpu.core_type<tc>, window_params = [{pipeline_mode = #tpu.pipeline_mode<synchronous>, transform_indices = @transform_0, window_bounds = array<i64: 1, 16>}, {pipeline_mode = #tpu.pipeline_mode<synchronous>, transform_indices = @transform_1, window_bounds = array<i64: 16, 72>}, {pipeline_mode = #tpu.pipeline_mode<synchronous>, transform_indices = @transform_2, window_bounds = array<i64: 1, 1>}, {pipeline_mode = #tpu.pipeline_mode<synchronous>, transform_indices = @transform_3, window_bounds = array<i64: 1, 72>}]} {
    %c0 = arith.constant 0 : index
    %c0_0 = arith.constant 0 : index
    %0 = vector.load %arg1[%c0, %c0_0] : memref<1x16xf32, #tpu.memory_space<vmem>>, vector<1x16xf32>
    %c0_1 = arith.constant 0 : index
    %c0_2 = arith.constant 0 : index
    %1 = vector.load %arg2[%c0_1, %c0_2] : memref<16x72xf32, #tpu.memory_space<vmem>>, vector<16x72xf32>
    %cst = arith.constant dense<0.000000e+00> : vector<1x72xf32>
    %2 = tpu.matmul %0, %1, %cst {dimension_numbers = #tpu.dot_dimension_numbers<[1], [0], [0], [1], [0, 0, 1, 1], [], []>} : vector<1x16xf32>, vector<16x72xf32>, vector<1x72xf32> -> vector<1x72xf32>
    %c0_3 = arith.constant 0 : index
    %c0_4 = arith.constant 0 : index
    %3 = vector.load %arg3[%c0_3, %c0_4] : memref<1x1xf32, #tpu.memory_space<vmem>>, vector<1x1xf32>
    %4 = vector.extract %3[0, 0] : f32 from vector<1x1xf32>
    %5 = vector.broadcast %4 : f32 to vector<1x72xf32>
    %6 = arith.addf %2, %5 : vector<1x72xf32>
    %c0_5 = arith.constant 0 : index
    %c0_6 = arith.constant 0 : index
    %7 = vector.load %arg4[%c0_5, %c0_6] : memref<1x72xf32, #tpu.memory_space<vmem>>, vector<1x72xf32>
    tpu.vector_store %arg4[%c0_5, %c0_6], %6 {strides = array<i32>} : memref<1x72xf32, #tpu.memory_space<vmem>>, vector<1x72xf32>,
    return
  }
  func.func @transform_0(%arg0: i32) -> (i32, i32) {
    %c0_i32 = arith.constant 0 : i32
    %c0_i32_0 = arith.constant 0 : i32
    %c0_i32_1 = arith.constant 0 : i32
    return %c0_i32, %c0_i32_0 : i32, i32
  }
  func.func @transform_1(%arg0: i32) -> (i32, i32) {
    %c0_i32 = arith.constant 0 : i32
    %c0_i32_0 = arith.constant 0 : i32
    %c0_i32_1 = arith.constant 0 : i32
    return %c0_i32, %c0_i32_0 : i32, i32
  }
  func.func @transform_2(%arg0: i32) -> (i32, i32) {
    %c0_i32 = arith.constant 0 : i32
    %c0_i32_0 = arith.constant 0 : i32
    %c0_i32_1 = arith.constant 0 : i32
    return %c0_i32, %c0_i32_0 : i32, i32
  }
  func.func @transform_3(%arg0: i32) -> (i32, i32) {
    %c0_i32 = arith.constant 0 : i32
    %c0_i32_0 = arith.constant 0 : i32
    %c0_i32_1 = arith.constant 0 : i32
    return %c0_i32, %c0_i32_0 : i32, i32
  }
}

</mosaic_0001>

<llo_original>
// kernel: tpu_custom_call.1
$region0: #{tpu_custom_call.1}
  #allocation0 [shape = 'u32[]', space=smem, size = 0x4, offset = 0x4, fixed_abs, tag = 'smem constant byte address 0x4 - core index']
  #allocation1 [shape = 'u32[144,128]{1,0:T(1,128)}', space=vmem, size = 0x12000, scoped, tag = 'internal scratch']
  #allocation2 [shape = 'f32[1,1]{1,0:T(1,128)S(1)}', space=vmem, size = 0x200, scoped, tag = 'scoped memory for tpu_custom_call.1']
  %s0 = inlined_call_operand.vmem [shape: f32[1,16], index: 0, kind: input, shape index: {}]
  %s1 = inlined_call_operand.hbm [shape: f32[16,72], index: 1, kind: input, shape index: {}]
  %s2 = inlined_call_operand.<no memory space> [shape: f32[1,1], index: 2, kind: input, shape index: {}]
  %s3 = inlined_call_operand.hbm [shape: f32[1,72], index: 3, kind: output, shape index: {}]
  %s4 = sld [smem:[#allocation0]]
  $region26: #{tpu_custom_call.1} parent=0
    _
  %s6 = ssub.s32 1, %s4
  %s7 = scalar_select 0, %s6, %s4
  %v8 = vstv %s2
  %9 = vst [vmem:[#allocation2] sm:$0x1] %v8
  $region1: #{tpu_custom_call.1} parent=0
    #allocation3 [shape = 'u8[8192]{0}', space=vmem, size = 0x2000, scoped, tag = 'input window, operand 1, single buffered']
    #allocation4 [shape = 's32[1]{0}', space=sflag, size = 0x4, scoped, tag = 'scoped memory for tpu_custom_call.1']
    #allocation5 [shape = 's32[1]{0}', space=sflag, size = 0x4, scoped, tag = 'scoped memory for tpu_custom_call.1']
    #allocation6 [shape = 'u8[512]{0}', space=vmem, size = 0x400, scoped, tag = 'output window, operand 0, single buffered']
    %10 = vsyncpa [#allocation4], 0
    %11 = vsyncpa [#allocation5], 0
    // Predicated region
    $region2: #{tpu_custom_call.1} parent=1 // pred_check
      _
    $region3: #{tpu_custom_call.1} parent=1 // pred_check_branch
      %13 = sbr.rel (0) target = $region5
    $region4: #{tpu_custom_call.1} parent=1 // pred_region
      _
    $region5: #{tpu_custom_call.1} parent=1 // pred_fallthru
      _
    // Predicated region
    $region6: #{tpu_custom_call.1} parent=1 // pred_check
      _
    $region7: #{tpu_custom_call.1} parent=1 // pred_check_branch
      %15 = sbr.rel (0) target = $region9
    $region8: #{tpu_custom_call.1} parent=1 // pred_region
      %s17 = ssub.s32 256, 256
      %18 = vsyncadd [#allocation4], %s17
      %s19 = sshll.u32 [#allocation3], 4
      %s20 = int_to_ptr.vmem [resolvable:$true] %s19
      %25 = dma.hbm_to_vmem [thread:$0]  %s1, 256, %s20, [#allocation4], 128, 128, 8
    $region9: #{tpu_custom_call.1} parent=1 // pred_fallthru
      _
    // Predicated region
    $region10: #{tpu_custom_call.1} parent=1 // pred_check
      _
    $region11: #{tpu_custom_call.1} parent=1 // pred_check_branch
      %27 = sbr.rel (0) target = $region13
    $region12: #{tpu_custom_call.1} parent=1 // pred_region
      _
    $region13: #{tpu_custom_call.1} parent=1 // pred_fallthru
      _
    // Predicated region
    $region14: #{tpu_custom_call.1} parent=1 // pred_check
      _
    $region15: #{tpu_custom_call.1} parent=1 // pred_check_branch
      %29 = sbr.rel (0) target = $region17
    $region16: #{tpu_custom_call.1} parent=1 // pred_region
      %30 = dma.done [#allocation4], 256
    $region17: #{tpu_custom_call.1} parent=1 // pred_fallthru
      _
    %v31 = vld [vmem:[%s0] sm:$0x1]
    %v32 = vld [vmem:[#allocation3] sm:$0xff]
    %v33 = vld [vmem:[#allocation3 + $0x8] sm:$0xff]
    %v34 = vld [vmem:[#allocation2] sm:$0x1]
    %s35 = vtos %v34
    %v36 = vstv %s35
    %vm37 = vcmask 130048
    %v39 = vsel %vm37, %v31, 0
    %41 = vmatprep.subr.mxu0 0.0
    %42 = vmatpush1.msra.mxu0 0.0
    %43 = vmatprep.subr.mxu0 0.0
    %44 = vmatpush1.msra.mxu0 0.0
    %45 = vmatprep.subr.mxu0 0.0
    %46 = vmatpush1.msra.mxu0 0.0
    %47 = vmatprep.subr.mxu0 0.0
    %48 = vmatpush1.msra.mxu0 0.0
    %49 = vmatprep.subr.mxu0 0.0
    %50 = vmatpush1.msra.mxu0 0.0
    %51 = vmatprep.subr.mxu0 0.0
    %52 = vmatpush1.msra.mxu0 0.0
    %53 = vmatprep.subr.mxu0 0.0
    %54 = vmatpush1.msra.mxu0 0.0
    %55 = vmatprep.subr.mxu0 0.0
    %56 = vmatpush1.msra.mxu0 0.0
    %57 = vmatprep.subr.mxu0 0.0
    %58 = vmatpush1.msra.mxu0 0.0
    %59 = vmatprep.subr.mxu0 0.0
    %60 = vmatpush1.msra.mxu0 0.0
    %61 = vmatprep.subr.mxu0 0.0
    %62 = vmatpush1.msra.mxu0 0.0
    %63 = vmatprep.subr.mxu0 0.0
    %64 = vmatpush1.msra.mxu0 0.0
    %65 = vmatprep.subr.mxu0 0.0
    %66 = vmatpush1.msra.mxu0 0.0
    %67 = vmatprep.subr.mxu0 0.0
    %68 = vmatpush1.msra.mxu0 0.0
    %69 = vmatprep.subr.mxu0 0.0
    %70 = vmatpush1.msra.mxu0 %v33
    %71 = vmatprep.subr.mxu0 0.0
    %72 = vmatpush1.msra.mxu0 %v32
    %73 = vmatprep.subr.mxu0 0.0
    %74 = vmatpush2.msra.mxu0 0.0
    %75 = vmatprep.subr.mxu0 0.0
    %76 = vmatpush2.msra.mxu0 0.0
    %77 = vmatprep.subr.mxu0 0.0
    %78 = vmatpush2.msra.mxu0 0.0
    %79 = vmatprep.subr.mxu0 0.0
    %80 = vmatpush2.msra.mxu0 0.0
    %81 = vmatprep.subr.mxu0 0.0
    %82 = vmatpush2.msra.mxu0 0.0
    %83 = vmatprep.subr.mxu0 0.0
    %84 = vmatpush2.msra.mxu0 0.0
    %85 = vmatprep.subr.mxu0 0.0
    %86 = vmatpush2.msra.mxu0 0.0
    %87 = vmatprep.subr.mxu0 0.0
    %88 = vmatpush2.msra.mxu0 0.0
    %89 = vmatprep.subr.mxu0 0.0
    %90 = vmatpush2.msra.mxu0 0.0
    %91 = vmatprep.subr.mxu0 0.0
    %92 = vmatpush2.msra.mxu0 0.0
    %93 = vmatprep.subr.mxu0 0.0
    %94 = vmatpush2.msra.mxu0 0.0
    %95 = vmatprep.subr.mxu0 0.0
    %96 = vmatpush2.msra.mxu0 0.0
    %97 = vmatprep.subr.mxu0 0.0
    %98 = vmatpush2.msra.mxu0 0.0
    %99 = vmatprep.subr.mxu0 0.0
    %100 = vmatpush2.msra.mxu0 0.0
    %101 = vmatprep.subr.mxu0 0.0
    %102 = vmatpush2.msra.mxu0 0.0
    %103 = vmatprep.subr.mxu0 0.0
    %104 = vmatpush2.msra.mxu0 0.0
    %105 = vmatprep.mubr.f32.mxu0 0.0
    %106 = vmatmul.mubr.f32.gmra.mxu0 %v39
    %v107 = vpop.f32.mrf.mxu0
    %v108 = vadd.f32 %v36, %v107
    %v109 = vpop.f32.mrf.mxu0
    %110 = vdwg.mxu0
    %vm111 = vcmask 581632
    %112 = vst.msk [vmem:[#allocation6] sm:$0x1] %vm111, %v108
    // Predicated region
    $region18: #{tpu_custom_call.1} parent=1 // pred_check
      _
    $region19: #{tpu_custom_call.1} parent=1 // pred_check_branch
      %114 = sbr.rel (0) target = $region21
    $region20: #{tpu_custom_call.1} parent=1 // pred_region
      %s116 = ssub.s32 16, 16
      %117 = vsyncadd [#allocation5], %s116
      %s119 = sshll.u32 [#allocation6], 4
      %s120 = int_to_ptr.vmem [resolvable:$true] %s119
      %122 = dma.vmem_to_hbm [thread:$0]  %s120, 16, %s3, [#allocation5]
    $region21: #{tpu_custom_call.1} parent=1 // pred_fallthru
      _
    // Predicated region
    $region22: #{tpu_custom_call.1} parent=1 // pred_check
      _
    $region23: #{tpu_custom_call.1} parent=1 // pred_check_branch
      %124 = sbr.rel (0) target = $region25
    $region24: #{tpu_custom_call.1} parent=1 // pred_region
      %125 = dma.done [#allocation5], 16
    $region25: #{tpu_custom_call.1} parent=1 // pred_fallthru
      _
    %126 = vsyncpa [#allocation4], 1
    %127 = vsyncpa [#allocation5], 1

</llo_original>
